<compile_context>
chip_gen: v7x
topology: tpu7x:2x2x1
jax: 0.10.0
libtpu: 0.0.40
codegen_flags: <defaults>
</compile_context>

<pallas_src>
import functools

import jax
import jax.numpy as jnp
from jax import lax
from jax.experimental import pallas as pl
from jax.experimental.pallas import tpu as pltpu


_INV_SQRT2 = 0.7071067811865476


def _erf(u):
    """erf via Abramowitz & Stegun 7.1.26 (max abs err ~1.5e-7, f32)."""
    a1, a2, a3, a4, a5 = (0.254829592, -0.284496736, 1.421413741,
                          -1.453152027, 1.061405429)
    p = 0.3275911
    au = jnp.abs(u)
    t = 1.0 / (1.0 + p * au)
    poly = ((((a5 * t + a4) * t + a3) * t + a2) * t + a1) * t
    e = 1.0 - poly * jnp.exp(-au * au)
    return jnp.where(u >= 0, e, -e)


def dwconv_block_kernel(x_ref, dww_ref, dwb_ref, gamma_ref, beta_ref,
                        pw_ref, pwb_ref, rc_ref, gmat_ref, o_ref,
                        *, K, eps, H, W):
    # x_ref    : (1, Cin, P)   one image, channels-first, P = H*W (lane axis)
    # dww_ref  : (Cin, K*K)    depthwise weights, channel-major
    # dwb_ref  : (Cin, 1)      depthwise bias
    # gamma/beta_ref : (Cin,1) GroupNorm affine
    # pw_ref   : (Cout, Cin)   pointwise (1x1 conv) weight
    # pwb_ref  : (Cout, 1)     pointwise bias
    # rc_ref   : (2, P) int32  rc[0] = pixel row index, rc[1] = pixel col index
    # gmat_ref : (Cin, Cin)    same-group averaging matrix (1/(cpg*H*W) or 0)
    # o_ref    : (1, Cout, P)  lane-dense output image
    _, Cin, P = x_ref.shape
    pad = K // 2

    x = x_ref[0]                                   # (Cin, P) f32
    w_all = dww_ref[...]                           # (Cin, K*K)
    row = rc_ref[0:1, :]                           # (1, P) int32
    col = rc_ref[1:2, :]                           # (1, P) int32

    # ---- depthwise KxK conv: static lane rolls (XLU) + boundary masks (VPU) ----
    acc = jnp.zeros((Cin, P), jnp.float32)
    for kh in range(K):
        dh = kh - pad
        for kw in range(K):
            dw = kw - pad
            s = dh * W + dw                        # flattened neighbour offset
            shifted = x if s == 0 else pltpu.roll(x, shift=(-s) % P, axis=1)
            conds = []
            if dh < 0:
                conds.append(row >= -dh)
            if dh > 0:
                conds.append(row < H - dh)
            if dw < 0:
                conds.append(col >= -dw)
            if dw > 0:
                conds.append(col < W - dw)
            if conds:
                ok = conds[0]
                for c in conds[1:]:
                    ok = ok & c
                shifted = shifted * ok.astype(jnp.float32)
            t = kh * K + kw
            acc = acc + shifted * w_all[:, t:t + 1]
    y = acc + dwb_ref[...]                         # (Cin, P)

    # ---- GroupNorm: exact mean / mean-shifted variance over the whole image ----
    gmat = gmat_ref[...]
    mean = jnp.dot(gmat, jnp.sum(y, axis=1, keepdims=True),
                   preferred_element_type=jnp.float32)        # (Cin, 1)
    cen = y - mean
    var = jnp.dot(gmat, jnp.sum(cen * cen, axis=1, keepdims=True),
                  preferred_element_type=jnp.float32)         # (Cin, 1)
    inv = lax.rsqrt(var + jnp.float32(eps))
    y_norm = cen * (gamma_ref[...] * inv) + beta_ref[...]     # (Cin, P)

    # ---- pointwise 1x1 conv on the MXU (f32 operands, f32 accumulation) ----
    z = jnp.dot(pw_ref[...], y_norm, preferred_element_type=jnp.float32)
    z = z + pwb_ref[...]                                      # (Cout, P)

    # ---- exact (erf-based) GELU, lane-dense store ----
    z = 0.5 * z * (1.0 + _erf(z * _INV_SQRT2))
    o_ref[0] = z.astype(o_ref.dtype)


def _vmem_capacity_bytes():
    try:
        return int(pltpu.get_tpu_info().vmem_capacity_bytes)
    except Exception:                 # conservative default: v7x per-core VMEM
        return 64 * 1024 * 1024


def dwconv_block(x_nchw, dww, dwb, gamma, beta, pww, pwb, *,
                 kernel_size=3, eps=1e-5, num_groups=None,
                 core_parallel_batch=False):
    """Forward pass of DWConvBlock. x_nchw: (N, Cin, H, W) -> (N, Cout, H, W)."""
    N, Cin, H, W = x_nchw.shape
    Cout = pww.shape[0]
    K = kernel_size
    assert K % 2 == 1, "odd kernel sizes only (module keeps spatial size)"
    G = min(32, Cin) if num_groups is None else num_groups
    assert Cin % G == 0
    cpg = Cin // G
    P = H * W

    # Free relayouts only: no transpose, no pad, no extra HBM pass over x.
    x2 = x_nchw.reshape(N, Cin, P).astype(jnp.float32)
    dww2 = dww.reshape(Cin, K * K).astype(jnp.float32)
    dwb2 = dwb.reshape(Cin, 1).astype(jnp.float32)
    gamma2 = gamma.reshape(Cin, 1).astype(jnp.float32)
    beta2 = beta.reshape(Cin, 1).astype(jnp.float32)
    pw2 = pww.reshape(Cout, Cin).astype(jnp.float32)
    pwb2 = pwb.reshape(Cout, 1).astype(jnp.float32)

    # Tiny compile-time-constant tables (avoids in-kernel int div/mod and per-step
    # rebuilds): pixel (row, col) indices and the same-group averaging matrix.
    ids = jnp.arange(P, dtype=jnp.int32)
    rc = jnp.stack([ids // W, ids % W], axis=0)                          # (2, P)
    gid = jnp.arange(Cin, dtype=jnp.int32) // cpg
    gmat = (gid[:, None] == gid[None, :]).astype(jnp.float32) / float(cpg * P)

    # Generation-aware VMEM budget: ~3/4 of physical VMEM, capped at 100 MiB
    # (=> ~96 MiB on 128 MiB v5e/v6e, ~48 MiB on 64 MiB v7x).
    cap = _vmem_capacity_bytes()
    vmem_limit = max(32 * 1024 * 1024, min(cap * 3 // 4, 100 * 1024 * 1024))

    # Rough per-step VMEM need: Pallas-managed double-buffered in/out blocks plus
    # the live f32 temporaries of the fused body, plus params / tables.
    est_vmem = (2 * (Cin + Cout) * P * 4
                + (5 * Cin + 2 * Cout) * P * 4
                + (Cin * Cin + Cin * (K * K + 4) + Cout * (Cin + 1) + 2 * P) * 4)
    if est_vmem > vmem_limit:
        # TODO(synk): add a row-tiled two-pass (stats, then normalize) fallback
        # for images whose activations do not fit in VMEM.
        raise NotImplementedError(
            f"image too large for the single-pass kernel: ~{est_vmem} B VMEM "
            f"needed, budget {vmem_limit} B")

    kernel = functools.partial(dwconv_block_kernel, K=K, eps=eps, H=H, W=W)

    flops = int(N * (2 * K * K * Cin * P + 2 * Cin * Cout * P
                     + 10 * Cin * P + 10 * Cout * P))
    transcendentals = int(N * (Cout * P + Cin))
    bytes_accessed = int(N * (Cin + Cout) * P * 4
                         + (Cin * (K * K + 4) + Cout * (Cin + 1)
                            + 2 * P + Cin * Cin) * 4)

    # v7x: set core_parallel_batch=True (N >= 2) to shard the batch across both
    # TensorCores; plain "parallel" kept as the portable default.
    dim_sem = (pltpu.CORE_PARALLEL,) if core_parallel_batch else ("parallel",)

    out_flat = pl.pallas_call(
        kernel,
        out_shape=jax.ShapeDtypeStruct((N, Cout, P), jnp.float32),
        grid_spec=pltpu.PrefetchScalarGridSpec(
            num_scalar_prefetch=0,
            grid=(N,),                                   # one image per step
            in_specs=[
                pl.BlockSpec((1, Cin, P), lambda n: (n, 0, 0)),   # x image
                pl.BlockSpec((Cin, K * K), lambda n: (0, 0)),     # dw weight
                pl.BlockSpec((Cin, 1), lambda n: (0, 0)),         # dw bias
                pl.BlockSpec((Cin, 1), lambda n: (0, 0)),         # gamma
                pl.BlockSpec((Cin, 1), lambda n: (0, 0)),         # beta
                pl.BlockSpec((Cout, Cin), lambda n: (0, 0)),      # pw weight
                pl.BlockSpec((Cout, 1), lambda n: (0, 0)),        # pw bias
                pl.BlockSpec((2, P), lambda n: (0, 0)),           # row/col ids
                pl.BlockSpec((Cin, Cin), lambda n: (0, 0)),       # group matrix
            ],
            out_specs=pl.BlockSpec((1, Cout, P), lambda n: (n, 0, 0)),
        ),
        compiler_params=pltpu.CompilerParams(
            dimension_semantics=dim_sem,
            vmem_limit_bytes=int(vmem_limit)),
        cost_estimate=pl.CostEstimate(flops=flops,
                                      transcendentals=transcendentals,
                                      bytes_accessed=bytes_accessed),
    )(x2, dww2, dwb2, gamma2, beta2, pw2, pwb2, rc, gmat)

    return out_flat.reshape(N, Cout, H, W)


def ref_forward(x, dww, dwb, gamma, beta, pww, pwb, num_groups, eps=1e-5):
    """Pure-JAX reference matching the PyTorch module semantics (NCHW)."""
    y = lax.conv_general_dilated(
        x, dww, window_strides=(1, 1), padding="SAME",
        feature_group_count=x.shape[1],
        dimension_numbers=("NCHW", "OIHW", "NCHW"),
        precision=lax.Precision.HIGHEST)
    y = y + dwb[None, :, None, None]
    N, C, H, W = y.shape
    yg = y.reshape(N, num_groups, C // num_groups, H, W)
    mean = yg.mean(axis=(2, 3, 4), keepdims=True)
    var = yg.var(axis=(2, 3, 4), keepdims=True)
    yn = (yg - mean) / jnp.sqrt(var + eps)
    yn = yn.reshape(N, C, H, W) * gamma[None, :, None, None] + beta[None, :, None, None]
    z = jnp.einsum("nchw,oc->nohw", yn, pww[:, :, 0, 0],
                   precision=lax.Precision.HIGHEST) + pwb[None, :, None, None]
    return jax.nn.gelu(z, approximate=False)


def _run_case(key, N, Cin, Cout, H, W, K=3):
    ks = jax.random.split(key, 7)
    x = jax.random.normal(ks[0], (N, Cin, H, W), jnp.float32)
    dww = 0.2 * jax.random.normal(ks[1], (Cin, 1, K, K), jnp.float32)      # dwconv.weight
    dwb = 0.1 * jax.random.normal(ks[2], (Cin,), jnp.float32)              # dwconv.bias
    gamma = 1.0 + 0.1 * jax.random.normal(ks[3], (Cin,), jnp.float32)      # norm.weight
    beta = 0.1 * jax.random.normal(ks[4], (Cin,), jnp.float32)             # norm.bias
    pww = 0.2 * jax.random.normal(ks[5], (Cout, Cin, 1, 1), jnp.float32)   # pwconv.weight
    pwb = 0.1 * jax.random.normal(ks[6], (Cout,), jnp.float32)             # pwconv.bias

    out = dwconv_block(x, dww, dwb, gamma, beta, pww, pwb, kernel_size=K)
    out = jax.block_until_ready(out)

    ref = ref_forward(x, dww, dwb, gamma, beta, pww, pwb, num_groups=min(32, Cin))
    assert out.shape == (N, Cout, H, W)
    assert jnp.allclose(out, ref, rtol=2e-2, atol=2e-2), (
        f"mismatch vs reference, max abs err {jnp.max(jnp.abs(out - ref)):.3e}")


if __name__ == "__main__":
    key = jax.random.PRNGKey(0)
    k1, k2 = jax.random.split(key)
    # groups == channels (cpg = 1): the small example shape from the module
    _run_case(k1, N=2, Cin=4, Cout=8, H=16, W=16)
    # 32 groups of 2 channels: exercises the real GroupNorm group reduction
    _run_case(k2, N=1, Cin=64, Cout=32, H=16, W=16)
    print("KERNEL_OK")
</pallas_src>

<mosaic_0001>
module attributes {stable_mosaic.version = 11 : i64} {
  func.func @dwconv_block_kernel(%arg0: i32, %arg1: memref<1x4x256xf32, #tpu.memory_space<vmem>>, %arg2: memref<4x9xf32, #tpu.memory_space<vmem>>, %arg3: memref<4x1xf32, #tpu.memory_space<vmem>>, %arg4: memref<4x1xf32, #tpu.memory_space<vmem>>, %arg5: memref<4x1xf32, #tpu.memory_space<vmem>>, %arg6: memref<8x4xf32, #tpu.memory_space<vmem>>, %arg7: memref<8x1xf32, #tpu.memory_space<vmem>>, %arg8: memref<2x256xi32, #tpu.memory_space<vmem>>, %arg9: memref<4x4xf32, #tpu.memory_space<vmem>>, %arg10: memref<1x8x256xf32, #tpu.memory_space<vmem>>) attributes {dimension_semantics = [#tpu.dimension_semantics<parallel>], iteration_bounds = array<i64: 2>, scalar_prefetch = 0 : i64, scratch_operands = 0 : i64, tpu.core_type = #tpu.core_type<tc>, window_params = [{transform_indices = @transform_0, window_bounds = array<i64: 1, 4, 256>}, {pipeline_mode = #tpu.pipeline_mode<synchronous>, transform_indices = @transform_1, window_bounds = array<i64: 4, 9>}, {pipeline_mode = #tpu.pipeline_mode<synchronous>, transform_indices = @transform_2, window_bounds = array<i64: 4, 1>}, {pipeline_mode = #tpu.pipeline_mode<synchronous>, transform_indices = @transform_3, window_bounds = array<i64: 4, 1>}, {pipeline_mode = #tpu.pipeline_mode<synchronous>, transform_indices = @transform_4, window_bounds = array<i64: 4, 1>}, {pipeline_mode = #tpu.pipeline_mode<synchronous>, transform_indices = @transform_5, window_bounds = array<i64: 8, 4>}, {pipeline_mode = #tpu.pipeline_mode<synchronous>, transform_indices = @transform_6, window_bounds = array<i64: 8, 1>}, {pipeline_mode = #tpu.pipeline_mode<synchronous>, transform_indices = @transform_7, window_bounds = array<i64: 2, 256>}, {pipeline_mode = #tpu.pipeline_mode<synchronous>, transform_indices = @transform_8, window_bounds = array<i64: 4, 4>}, {transform_indices = @transform_9, window_bounds = array<i64: 1, 8, 256>}]} {
    %c0 = arith.constant 0 : index
    %c0_0 = arith.constant 0 : index
    %c0_1 = arith.constant 0 : index
    %0 = vector.load %arg1[%c0, %c0_0, %c0_1] : memref<1x4x256xf32, #tpu.memory_space<vmem>>, vector<1x4x256xf32>
    %1 = vector.shape_cast %0 : vector<1x4x256xf32> to vector<4x256xf32>
    %c0_2 = arith.constant 0 : index
    %c0_3 = arith.constant 0 : index
    %2 = vector.load %arg2[%c0_2, %c0_3] : memref<4x9xf32, #tpu.memory_space<vmem>>, vector<4x9xf32>
    %c0_4 = arith.constant 0 : index
    %c0_5 = arith.constant 0 : index
    %3 = vector.load %arg8[%c0_4, %c0_5] : memref<2x256xi32, #tpu.memory_space<vmem>>, vector<1x256xi32>
    %c1 = arith.constant 1 : index
    %c0_6 = arith.constant 0 : index
    %4 = vector.load %arg8[%c1, %c0_6] : memref<2x256xi32, #tpu.memory_space<vmem>>, vector<1x256xi32>
    %cst = arith.constant 0.000000e+00 : f32
    %5 = vector.broadcast %cst : f32 to vector<4x256xf32>
    %c17_i32 = arith.constant 17 : i32
    %6 = tpu.dynamic_rotate %1 by %c17_i32 dim 1 : vector<4x256xf32>, i32 -> vector<4x256xf32>
    %c1_i32 = arith.constant 1 : i32
    %7 = vector.broadcast %c1_i32 : i32 to vector<1x256xi32>
    %8 = arith.cmpi sge, %3, %7 : vector<1x256xi32>
    %c1_i32_7 = arith.constant 1 : i32
    %9 = vector.broadcast %c1_i32_7 : i32 to vector<1x256xi32>
    %10 = arith.cmpi sge, %4, %9 : vector<1x256xi32>
    %11 = arith.andi %8, %10 : vector<1x256xi1>
    %12 = arith.extui %11 : vector<1x256xi1> to vector<1x256xi32>
    %13 = arith.sitofp %12 : vector<1x256xi32> to vector<1x256xf32>
    %14 = vector.broadcast %13 : vector<1x256xf32> to vector<4x256xf32>
    %15 = arith.mulf %6, %14 : vector<4x256xf32>
    %16 = vector.extract_strided_slice %2 {offsets = [0, 0], sizes = [4, 1], strides = [1, 1]} : vector<4x9xf32> to vector<4x1xf32>
    %17 = vector.broadcast %16 : vector<4x1xf32> to vector<4x256xf32>
    %18 = arith.mulf %15, %17 : vector<4x256xf32>
    %19 = arith.addf %5, %18 : vector<4x256xf32>
    %c16_i32 = arith.constant 16 : i32
    %20 = tpu.dynamic_rotate %1 by %c16_i32 dim 1 : vector<4x256xf32>, i32 -> vector<4x256xf32>
    %c1_i32_8 = arith.constant 1 : i32
    %21 = vector.broadcast %c1_i32_8 : i32 to vector<1x256xi32>
    %22 = arith.cmpi sge, %3, %21 : vector<1x256xi32>
    %23 = arith.extui %22 : vector<1x256xi1> to vector<1x256xi32>
    %24 = arith.sitofp %23 : vector<1x256xi32> to vector<1x256xf32>
    %25 = vector.broadcast %24 : vector<1x256xf32> to vector<4x256xf32>
    %26 = arith.mulf %20, %25 : vector<4x256xf32>
    %27 = vector.extract_strided_slice %2 {offsets = [0, 1], sizes = [4, 1], strides = [1, 1]} : vector<4x9xf32> to vector<4x1xf32>
    %28 = vector.broadcast %27 : vector<4x1xf32> to vector<4x256xf32>
    %29 = arith.mulf %26, %28 : vector<4x256xf32>
    %30 = arith.addf %19, %29 : vector<4x256xf32>
    %c15_i32 = arith.constant 15 : i32
    %31 = tpu.dynamic_rotate %1 by %c15_i32 dim 1 : vector<4x256xf32>, i32 -> vector<4x256xf32>
    %c1_i32_9 = arith.constant 1 : i32
    %32 = vector.broadcast %c1_i32_9 : i32 to vector<1x256xi32>
    %33 = arith.cmpi sge, %3, %32 : vector<1x256xi32>
    %c15_i32_10 = arith.constant 15 : i32
    %34 = vector.broadcast %c15_i32_10 : i32 to vector<1x256xi32>
    %35 = arith.cmpi slt, %4, %34 : vector<1x256xi32>
    %36 = arith.andi %33, %35 : vector<1x256xi1>
    %37 = arith.extui %36 : vector<1x256xi1> to vector<1x256xi32>
    %38 = arith.sitofp %37 : vector<1x256xi32> to vector<1x256xf32>
    %39 = vector.broadcast %38 : vector<1x256xf32> to vector<4x256xf32>
    %40 = arith.mulf %31, %39 : vector<4x256xf32>
    %41 = vector.extract_strided_slice %2 {offsets = [0, 2], sizes = [4, 1], strides = [1, 1]} : vector<4x9xf32> to vector<4x1xf32>
    %42 = vector.broadcast %41 : vector<4x1xf32> to vector<4x256xf32>
    %43 = arith.mulf %40, %42 : vector<4x256xf32>
    %44 = arith.addf %30, %43 : vector<4x256xf32>
    %c1_i32_11 = arith.constant 1 : i32
    %45 = tpu.dynamic_rotate %1 by %c1_i32_11 dim 1 : vector<4x256xf32>, i32 -> vector<4x256xf32>
    %c1_i32_12 = arith.constant 1 : i32
    %46 = vector.broadcast %c1_i32_12 : i32 to vector<1x256xi32>
    %47 = arith.cmpi sge, %4, %46 : vector<1x256xi32>
    %48 = arith.extui %47 : vector<1x256xi1> to vector<1x256xi32>
    %49 = arith.sitofp %48 : vector<1x256xi32> to vector<1x256xf32>
    %50 = vector.broadcast %49 : vector<1x256xf32> to vector<4x256xf32>
    %51 = arith.mulf %45, %50 : vector<4x256xf32>
    %52 = vector.extract_strided_slice %2 {offsets = [0, 3], sizes = [4, 1], strides = [1, 1]} : vector<4x9xf32> to vector<4x1xf32>
    %53 = vector.broadcast %52 : vector<4x1xf32> to vector<4x256xf32>
    %54 = arith.mulf %51, %53 : vector<4x256xf32>
    %55 = arith.addf %44, %54 : vector<4x256xf32>
    %56 = vector.extract_strided_slice %2 {offsets = [0, 4], sizes = [4, 1], strides = [1, 1]} : vector<4x9xf32> to vector<4x1xf32>
    %57 = vector.broadcast %56 : vector<4x1xf32> to vector<4x256xf32>
    %58 = arith.mulf %1, %57 : vector<4x256xf32>
    %59 = arith.addf %55, %58 : vector<4x256xf32>
    %c255_i32 = arith.constant 255 : i32
    %60 = tpu.dynamic_rotate %1 by %c255_i32 dim 1 : vector<4x256xf32>, i32 -> vector<4x256xf32>
    %c15_i32_13 = arith.constant 15 : i32
    %61 = vector.broadcast %c15_i32_13 : i32 to vector<1x256xi32>
    %62 = arith.cmpi slt, %4, %61 : vector<1x256xi32>
    %63 = arith.extui %62 : vector<1x256xi1> to vector<1x256xi32>
    %64 = arith.sitofp %63 : vector<1x256xi32> to vector<1x256xf32>
    %65 = vector.broadcast %64 : vector<1x256xf32> to vector<4x256xf32>
    %66 = arith.mulf %60, %65 : vector<4x256xf32>
    %67 = vector.extract_strided_slice %2 {offsets = [0, 5], sizes = [4, 1], strides = [1, 1]} : vector<4x9xf32> to vector<4x1xf32>
    %68 = vector.broadcast %67 : vector<4x1xf32> to vector<4x256xf32>
    %69 = arith.mulf %66, %68 : vector<4x256xf32>
    %70 = arith.addf %59, %69 : vector<4x256xf32>
    %c241_i32 = arith.constant 241 : i32
    %71 = tpu.dynamic_rotate %1 by %c241_i32 dim 1 : vector<4x256xf32>, i32 -> vector<4x256xf32>
    %c15_i32_14 = arith.constant 15 : i32
    %72 = vector.broadcast %c15_i32_14 : i32 to vector<1x256xi32>
    %73 = arith.cmpi slt, %3, %72 : vector<1x256xi32>
    %c1_i32_15 = arith.constant 1 : i32
    %74 = vector.broadcast %c1_i32_15 : i32 to vector<1x256xi32>
    %75 = arith.cmpi sge, %4, %74 : vector<1x256xi32>
    %76 = arith.andi %73, %75 : vector<1x256xi1>
    %77 = arith.extui %76 : vector<1x256xi1> to vector<1x256xi32>
    %78 = arith.sitofp %77 : vector<1x256xi32> to vector<1x256xf32>
    %79 = vector.broadcast %78 : vector<1x256xf32> to vector<4x256xf32>
    %80 = arith.mulf %71, %79 : vector<4x256xf32>
    %81 = vector.extract_strided_slice %2 {offsets = [0, 6], sizes = [4, 1], strides = [1, 1]} : vector<4x9xf32> to vector<4x1xf32>
    %82 = vector.broadcast %81 : vector<4x1xf32> to vector<4x256xf32>
    %83 = arith.mulf %80, %82 : vector<4x256xf32>
    %84 = arith.addf %70, %83 : vector<4x256xf32>
    %c240_i32 = arith.constant 240 : i32
    %85 = tpu.dynamic_rotate %1 by %c240_i32 dim 1 : vector<4x256xf32>, i32 -> vector<4x256xf32>
    %c15_i32_16 = arith.constant 15 : i32
    %86 = vector.broadcast %c15_i32_16 : i32 to vector<1x256xi32>
    %87 = arith.cmpi slt, %3, %86 : vector<1x256xi32>
    %88 = arith.extui %87 : vector<1x256xi1> to vector<1x256xi32>
    %89 = arith.sitofp %88 : vector<1x256xi32> to vector<1x256xf32>
    %90 = vector.broadcast %89 : vector<1x256xf32> to vector<4x256xf32>
    %91 = arith.mulf %85, %90 : vector<4x256xf32>
    %92 = vector.extract_strided_slice %2 {offsets = [0, 7], sizes = [4, 1], strides = [1, 1]} : vector<4x9xf32> to vector<4x1xf32>
    %93 = vector.broadcast %92 : vector<4x1xf32> to vector<4x256xf32>
    %94 = arith.mulf %91, %93 : vector<4x256xf32>
    %95 = arith.addf %84, %94 : vector<4x256xf32>
    %c239_i32 = arith.constant 239 : i32
    %96 = tpu.dynamic_rotate %1 by %c239_i32 dim 1 : vector<4x256xf32>, i32 -> vector<4x256xf32>
    %c15_i32_17 = arith.constant 15 : i32
    %97 = vector.broadcast %c15_i32_17 : i32 to vector<1x256xi32>
    %98 = arith.cmpi slt, %3, %97 : vector<1x256xi32>
    %c15_i32_18 = arith.constant 15 : i32
    %99 = vector.broadcast %c15_i32_18 : i32 to vector<1x256xi32>
    %100 = arith.cmpi slt, %4, %99 : vector<1x256xi32>
    %101 = arith.andi %98, %100 : vector<1x256xi1>
    %102 = arith.extui %101 : vector<1x256xi1> to vector<1x256xi32>
    %103 = arith.sitofp %102 : vector<1x256xi32> to vector<1x256xf32>
    %104 = vector.broadcast %103 : vector<1x256xf32> to vector<4x256xf32>
    %105 = arith.mulf %96, %104 : vector<4x256xf32>
    %106 = vector.extract_strided_slice %2 {offsets = [0, 8], sizes = [4, 1], strides = [1, 1]} : vector<4x9xf32> to vector<4x1xf32>
    %107 = vector.broadcast %106 : vector<4x1xf32> to vector<4x256xf32>
    %108 = arith.mulf %105, %107 : vector<4x256xf32>
    %109 = arith.addf %95, %108 : vector<4x256xf32>
    %c0_19 = arith.constant 0 : index
    %c0_20 = arith.constant 0 : index
    %110 = vector.load %arg3[%c0_19, %c0_20] : memref<4x1xf32, #tpu.memory_space<vmem>>, vector<4x1xf32>
    %111 = vector.broadcast %110 : vector<4x1xf32> to vector<4x256xf32>
    %112 = arith.addf %109, %111 : vector<4x256xf32>
    %c0_21 = arith.constant 0 : index
    %c0_22 = arith.constant 0 : index
    %113 = vector.load %arg9[%c0_21, %c0_22] : memref<4x4xf32, #tpu.memory_space<vmem>>, vector<4x4xf32>
    %cst_23 = arith.constant dense<0.000000e+00> : vector<4xf32>
    %114 = vector.multi_reduction <add>, %112, %cst_23 [1] : vector<4x256xf32> to vector<4xf32>
    %115 = vector.shape_cast %114 : vector<4xf32> to vector<4x1xf32>
    %cst_24 = arith.constant dense<0.000000e+00> : vector<4x1xf32>
    %116 = tpu.matmul %113, %115, %cst_24 {dimension_numbers = #tpu.dot_dimension_numbers<[1], [0], [0], [1], [0, 0, 1, 1], [], []>} : vector<4x4xf32>, vector<4x1xf32>, vector<4x1xf32> -> vector<4x1xf32>
    %117 = vector.broadcast %116 : vector<4x1xf32> to vector<4x256xf32>
    %118 = arith.subf %112, %117 : vector<4x256xf32>
    %119 = arith.mulf %118, %118 : vector<4x256xf32>
    %cst_25 = arith.constant dense<0.000000e+00> : vector<4xf32>
    %120 = vector.multi_reduction <add>, %119, %cst_25 [1] : vector<4x256xf32> to vector<4xf32>
    %121 = vector.shape_cast %120 : vector<4xf32> to vector<4x1xf32>
    %cst_26 = arith.constant dense<0.000000e+00> : vector<4x1xf32>
    %122 = tpu.matmul %113, %121, %cst_26 {dimension_numbers = #tpu.dot_dimension_numbers<[1], [0], [0], [1], [0, 0, 1, 1], [], []>} : vector<4x4xf32>, vector<4x1xf32>, vector<4x1xf32> -> vector<4x1xf32>
    %cst_27 = arith.constant 9.99999974E-6 : f32
    %123 = vector.broadcast %cst_27 : f32 to vector<4x1xf32>
    %124 = arith.addf %122, %123 : vector<4x1xf32>
    %125 = math.rsqrt %124 : vector<4x1xf32>
    %c0_28 = arith.constant 0 : index
    %c0_29 = arith.constant 0 : index
    %126 = vector.load %arg4[%c0_28, %c0_29] : memref<4x1xf32, #tpu.memory_space<vmem>>, vector<4x1xf32>
    %127 = arith.mulf %126, %125 : vector<4x1xf32>
    %128 = vector.broadcast %127 : vector<4x1xf32> to vector<4x256xf32>
    %129 = arith.mulf %118, %128 : vector<4x256xf32>
    %c0_30 = arith.constant 0 : index
    %c0_31 = arith.constant 0 : index
    %130 = vector.load %arg5[%c0_30, %c0_31] : memref<4x1xf32, #tpu.memory_space<vmem>>, vector<4x1xf32>
    %131 = vector.broadcast %130 : vector<4x1xf32> to vector<4x256xf32>
    %132 = arith.addf %129, %131 : vector<4x256xf32>
    %c0_32 = arith.constant 0 : index
    %c0_33 = arith.constant 0 : index
    %133 = vector.load %arg6[%c0_32, %c0_33] : memref<8x4xf32, #tpu.memory_space<vmem>>, vector<8x4xf32>
    %cst_34 = arith.constant dense<0.000000e+00> : vector<8x256xf32>
    %134 = tpu.matmul %133, %132, %cst_34 {dimension_numbers = #tpu.dot_dimension_numbers<[1], [0], [0], [1], [0, 0, 1, 1], [], []>} : vector<8x4xf32>, vector<4x256xf32>, vector<8x256xf32> -> vector<8x256xf32>
    %c0_35 = arith.constant 0 : index
    %c0_36 = arith.constant 0 : index
    %135 = vector.load %arg7[%c0_35, %c0_36] : memref<8x1xf32, #tpu.memory_space<vmem>>, vector<8x1xf32>
    %136 = vector.broadcast %135 : vector<8x1xf32> to vector<8x256xf32>
    %137 = arith.addf %134, %136 : vector<8x256xf32>
    %cst_37 = arith.constant 5.000000e-01 : f32
    %138 = vector.broadcast %cst_37 : f32 to vector<8x256xf32>
    %139 = arith.mulf %138, %137 : vector<8x256xf32>
    %cst_38 = arith.constant 0.707106769 : f32
    %140 = vector.broadcast %cst_38 : f32 to vector<8x256xf32>
    %141 = arith.mulf %137, %140 : vector<8x256xf32>
    %142 = math.absf %141 : vector<8x256xf32>
    %cst_39 = arith.constant 0.327591091 : f32
    %143 = vector.broadcast %cst_39 : f32 to vector<8x256xf32>
    %144 = arith.mulf %143, %142 : vector<8x256xf32>
    %cst_40 = arith.constant 1.000000e+00 : f32
    %145 = vector.broadcast %cst_40 : f32 to vector<8x256xf32>
    %146 = arith.addf %145, %144 : vector<8x256xf32>
    %cst_41 = arith.constant 1.000000e+00 : f32
    %147 = vector.broadcast %cst_41 : f32 to vector<8x256xf32>
    %148 = arith.divf %147, %146 : vector<8x256xf32>
    %cst_42 = arith.constant 1.06140542 : f32
    %149 = vector.broadcast %cst_42 : f32 to vector<8x256xf32>
    %150 = arith.mulf %149, %148 : vector<8x256xf32>
    %cst_43 = arith.constant -1.45315206 : f32
    %151 = vector.broadcast %cst_43 : f32 to vector<8x256xf32>
    %152 = arith.addf %150, %151 : vector<8x256xf32>
    %153 = arith.mulf %152, %148 : vector<8x256xf32>
    %cst_44 = arith.constant 1.42141378 : f32
    %154 = vector.broadcast %cst_44 : f32 to vector<8x256xf32>
    %155 = arith.addf %153, %154 : vector<8x256xf32>
    %156 = arith.mulf %155, %148 : vector<8x256xf32>
    %cst_45 = arith.constant -0.284496725 : f32
    %157 = vector.broadcast %cst_45 : f32 to vector<8x256xf32>
    %158 = arith.addf %156, %157 : vector<8x256xf32>
    %159 = arith.mulf %158, %148 : vector<8x256xf32>
    %cst_46 = arith.constant 0.254829586 : f32
    %160 = vector.broadcast %cst_46 : f32 to vector<8x256xf32>
    %161 = arith.addf %159, %160 : vector<8x256xf32>
    %162 = arith.mulf %161, %148 : vector<8x256xf32>
    %cst_47 = arith.constant 0.000000e+00 : f32
    %163 = vector.broadcast %cst_47 : f32 to vector<8x256xf32>
    %164 = arith.subf %163, %142 : vector<8x256xf32>
    %165 = arith.mulf %164, %142 : vector<8x256xf32>
    %166 = math.exp %165 : vector<8x256xf32>
    %167 = arith.mulf %162, %166 : vector<8x256xf32>
    %cst_48 = arith.constant 1.000000e+00 : f32
    %168 = vector.broadcast %cst_48 : f32 to vector<8x256xf32>
    %169 = arith.subf %168, %167 : vector<8x256xf32>
    %cst_49 = arith.constant 0.000000e+00 : f32
    %170 = vector.broadcast %cst_49 : f32 to vector<8x256xf32>
    %171 = arith.cmpf oge, %141, %170 : vector<8x256xf32>
    %cst_50 = arith.constant 0.000000e+00 : f32
    %172 = vector.broadcast %cst_50 : f32 to vector<8x256xf32>
    %173 = arith.subf %172, %169 : vector<8x256xf32>
    %174 = arith.select %171, %169, %173 : vector<8x256xi1>, vector<8x256xf32>
    %cst_51 = arith.constant 1.000000e+00 : f32
    %175 = vector.broadcast %cst_51 : f32 to vector<8x256xf32>
    %176 = arith.addf %175, %174 : vector<8x256xf32>
    %177 = arith.mulf %139, %176 : vector<8x256xf32>
    %c0_52 = arith.constant 0 : index
    %c0_53 = arith.constant 0 : index
    %c0_54 = arith.constant 0 : index
    %178 = vector.load %arg10[%c0_52, %c0_53, %c0_54] : memref<1x8x256xf32, #tpu.memory_space<vmem>>, vector<1x8x256xf32>
    %179 = vector.shape_cast %178 : vector<1x8x256xf32> to vector<8x256xf32>
    %180 = vector.shape_cast %177 : vector<8x256xf32> to vector<1x8x256xf32>
    tpu.vector_store %arg10[%c0_52, %c0_53, %c0_54], %180 {strides = array<i32>} : memref<1x8x256xf32, #tpu.memory_space<vmem>>, vector<1x8x256xf32>,
    return
  }
  func.func @transform_0(%arg0: i32) -> (i32, i32, i32) {
    %c0_i32 = arith.constant 0 : i32
    %c0_i32_0 = arith.constant 0 : i32
    %c0_i32_1 = arith.constant 0 : i32
    return %arg0, %c0_i32, %c0_i32_0 : i32, i32, i32
  }
  func.func @transform_1(%arg0: i32) -> (i32, i32) {
    %c0_i32 = arith.constant 0 : i32
    %c0_i32_0 = arith.constant 0 : i32
    %c0_i32_1 = arith.constant 0 : i32
    return %c0_i32, %c0_i32_0 : i32, i32
  }
  func.func @transform_2(%arg0: i32) -> (i32, i32) {
    %c0_i32 = arith.constant 0 : i32
    %c0_i32_0 = arith.constant 0 : i32
    %c0_i32_1 = arith.constant 0 : i32
    return %c0_i32, %c0_i32_0 : i32, i32
  }
  func.func @transform_3(%arg0: i32) -> (i32, i32) {
    %c0_i32 = arith.constant 0 : i32
    %c0_i32_0 = arith.constant 0 : i32
    %c0_i32_1 = arith.constant 0 : i32
    return %c0_i32, %c0_i32_0 : i32, i32
  }
  func.func @transform_4(%arg0: i32) -> (i32, i32) {
    %c0_i32 = arith.constant 0 : i32
    %c0_i32_0 = arith.constant 0 : i32
    %c0_i32_1 = arith.constant 0 : i32
    return %c0_i32, %c0_i32_0 : i32, i32
  }
  func.func @transform_5(%arg0: i32) -> (i32, i32) {
    %c0_i32 = arith.constant 0 : i32
    %c0_i32_0 = arith.constant 0 : i32
    %c0_i32_1 = arith.constant 0 : i32
    return %c0_i32, %c0_i32_0 : i32, i32
  }
  func.func @transform_6(%arg0: i32) -> (i32, i32) {
    %c0_i32 = arith.constant 0 : i32
    %c0_i32_0 = arith.constant 0 : i32
    %c0_i32_1 = arith.constant 0 : i32
    return %c0_i32, %c0_i32_0 : i32, i32
  }
  func.func @transform_7(%arg0: i32) -> (i32, i32) {
    %c0_i32 = arith.constant 0 : i32
    %c0_i32_0 = arith.constant 0 : i32
    %c0_i32_1 = arith.constant 0 : i32
    return %c0_i32, %c0_i32_0 : i32, i32
  }
  func.func @transform_8(%arg0: i32) -> (i32, i32) {
    %c0_i32 = arith.constant 0 : i32
    %c0_i32_0 = arith.constant 0 : i32
    %c0_i32_1 = arith.constant 0 : i32
    return %c0_i32, %c0_i32_0 : i32, i32
  }
  func.func @transform_9(%arg0: i32) -> (i32, i32, i32) {
    %c0_i32 = arith.constant 0 : i32
    %c0_i32_0 = arith.constant 0 : i32
    %c0_i32_1 = arith.constant 0 : i32
    return %arg0, %c0_i32, %c0_i32_0 : i32, i32, i32
  }
}

</mosaic_0001>

<llo_original>
// kernel: tpu_custom_call.1
$region0: #{tpu_custom_call.1}
  #allocation0 [shape = 'u32[]', space=smem, size = 0x4, offset = 0x4, fixed_abs, tag = 'smem constant byte address 0x4 - core index']
  #allocation1 [shape = 'u32[144,128]{1,0:T(1,128)}', space=vmem, size = 0x12000, scoped, tag = 'internal scratch']
  %s0 = inlined_call_operand.vmem [shape: f32[2,4,256], index: 0, kind: input, shape index: {}]
  %s1 = inlined_call_operand.vmem [shape: f32[4,9], index: 1, kind: input, shape index: {}]
  %s2 = inlined_call_operand.vmem [shape: f32[4,1], index: 2, kind: input, shape index: {}]
  %s3 = inlined_call_operand.vmem [shape: f32[4,1], index: 3, kind: input, shape index: {}]
  %s4 = inlined_call_operand.vmem [shape: f32[4,1], index: 4, kind: input, shape index: {}]
  %s5 = inlined_call_operand.vmem [shape: f32[8,4], index: 5, kind: input, shape index: {}]
  %s6 = inlined_call_operand.vmem [shape: f32[8,1], index: 6, kind: input, shape index: {}]
  %s7 = inlined_call_operand.vmem [shape: s32[2,256], index: 7, kind: input, shape index: {}]
  %s8 = inlined_call_operand.vmem [shape: f32[4,4], index: 8, kind: input, shape index: {}]
  %s9 = inlined_call_operand.hbm [shape: f32[2,8,256], index: 9, kind: output, shape index: {}]
  %s10 = sld [smem:[#allocation0]]
  $region69: #{tpu_custom_call.1} parent=0
    _
  %s12 = ssub.s32 1, %s10
  %s13 = scalar_select 0, %s12, %s10
  $region1: #{tpu_custom_call.1} parent=0
    #allocation2 [shape = 'u8[16384]{0}', space=vmem, size = 0x4000, scoped, tag = 'output window, operand 0']
    #allocation3 [shape = 's32[2]{0}', space=sflag, size = 0x8, scoped, tag = 'scoped memory for tpu_custom_call.1']
    %14 = vsyncpa [#allocation3], 0
    %s15 = scalar_lea.sflag [#allocation3], 1
    %16 = vsyncpa %s15, 0
    loop: start=0, step=1, limit=4
    $region2: #{tpu_custom_call.1} parent=1 // loop_pre_header
      _
    $region3: #{tpu_custom_call.1} parent=1 // loop_header
      %s18 = sphi 0, %s22
      %p19 = scmp.ge.s32.totalorder %s18, 4
      %s28 = sphi 0, %s30
      %s31 = sphi 0, %s28
      %s32 = sphi 0, %s31
      %s48 = sphi 0, %s32
      %s52 = sphi 0, %s52
      %s54 = sphi 0, %s52
      %s55 = sphi 0, %s54
      %s69 = sphi 0, %s55
      %s73 = sphi 0, %s73
      %s75 = sphi 0, %s73
      %s76 = sphi 0, %s75
      %s90 = sphi 0, %s76
      %s94 = sphi 0, %s94
      %s96 = sphi 0, %s94
      %s97 = sphi 0, %s96
      %s111 = sphi 0, %s97
      %s115 = sphi 0, %s115
      %s117 = sphi 0, %s115
      %s118 = sphi 0, %s117
      %s132 = sphi 0, %s118
      %s136 = sphi 0, %s136
      %s138 = sphi 0, %s136
      %s139 = sphi 0, %s138
      %s153 = sphi 0, %s139
      %s157 = sphi 0, %s157
      %s159 = sphi 0, %s157
      %s160 = sphi 0, %s159
      %s174 = sphi 0, %s160
      %s178 = sphi 0, %s178
      %s180 = sphi 0, %s178
      %s181 = sphi 0, %s180
      %s195 = sphi 0, %s181
      %s199 = sphi 0, %s199
      %s201 = sphi 0, %s199
      %s202 = sphi 0, %s201
      %s216 = sphi 0, %s202
      %s222 = sphi 0, %s224
      %s225 = sphi 0, %s222
      %s226 = sphi 0, %s225
      %s242 = sphi 0, %s226
    $region4: #{tpu_custom_call.1} parent=1 // loop_header_branch
      %21 = sbr.rel (%p19) target = $region8
    $region5: #{tpu_custom_call.1} parent=1 // loop_body
      %s23 = ssub.s32 %s18, 1
      %s24 = ssub.s32 %s18, 2
      %s25 = sadd.s32 %s18, 1
      %s26 = ssub.s32 %s18, %s25
      %p27 = scmp.eq.s32.totalorder %s26, 0
      %s29 = sadd.s32 %s28, 1
      %s30 = scalar_select %p27, %s28, %s29
      %p33 = pneg %p27
      %p34 = scmp.eq.s32.totalorder %s18, 1
      %p35 = por %p33, %p34
      %p36 = scmp.ne.s32.totalorder %s28, %s31
      %p37 = scmp.eq.s32.totalorder %s18, 0
      %p38 = por %p36, %p37
      %p39 = scmp.ne.s32.totalorder %s28, %s31
      %p40 = scmp.eq.s32.totalorder %s23, 1
      %p41 = por %p39, %p40
      %p42 = scmp.ne.s32.totalorder %s31, %s32
      %p43 = scmp.eq.s32.totalorder %s23, 0
      %p44 = por %p42, %p43
      %p45 = scmp.ne.s32.totalorder %s31, %s32
      %p46 = scmp.eq.s32.totalorder %s24, 1
      %p47 = por %p45, %p46
      %p49 = scmp.ne.s32.totalorder %s32, %s48
      %p50 = scmp.eq.s32.totalorder %s24, 0
      %p51 = por %p49, %p50
      %s53 = sadd.s32 %s52, 1
      %p56 = scmp.eq.s32.totalorder %s18, 1
      %p57 = scmp.ne.s32.totalorder %s52, %s54
      %p58 = scmp.eq.s32.totalorder %s18, 0
      %p59 = por %p57, %p58
      %p60 = scmp.ne.s32.totalorder %s52, %s54
      %p61 = scmp.eq.s32.totalorder %s23, 1
      %p62 = por %p60, %p61
      %p63 = scmp.ne.s32.totalorder %s54, %s55
      %p64 = scmp.eq.s32.totalorder %s23, 0
      %p65 = por %p63, %p64
      %p66 = scmp.ne.s32.totalorder %s54, %s55
      %p67 = scmp.eq.s32.totalorder %s24, 1
      %p68 = por %p66, %p67
      %p70 = scmp.ne.s32.totalorder %s55, %s69
      %p71 = scmp.eq.s32.totalorder %s24, 0
      %p72 = por %p70, %p71
      %s74 = sadd.s32 %s73, 1
      %p77 = scmp.eq.s32.totalorder %s18, 1
      %p78 = scmp.ne.s32.totalorder %s73, %s75
      %p79 = scmp.eq.s32.totalorder %s18, 0
      %p80 = por %p78, %p79
      %p81 = scmp.ne.s32.totalorder %s73, %s75
      %p82 = scmp.eq.s32.totalorder %s23, 1
      %p83 = por %p81, %p82
      %p84 = scmp.ne.s32.totalorder %s75, %s76
      %p85 = scmp.eq.s32.totalorder %s23, 0
      %p86 = por %p84, %p85
      %p87 = scmp.ne.s32.totalorder %s75, %s76
      %p88 = scmp.eq.s32.totalorder %s24, 1
      %p89 = por %p87, %p88
      %p91 = scmp.ne.s32.totalorder %s76, %s90
      %p92 = scmp.eq.s32.totalorder %s24, 0
      %p93 = por %p91, %p92
      %s95 = sadd.s32 %s94, 1
      %p98 = scmp.eq.s32.totalorder %s18, 1
      %p99 = scmp.ne.s32.totalorder %s94, %s96
      %p100 = scmp.eq.s32.totalorder %s18, 0
      %p101 = por %p99, %p100
      %p102 = scmp.ne.s32.totalorder %s94, %s96
      %p103 = scmp.eq.s32.totalorder %s23, 1
      %p104 = por %p102, %p103
      %p105 = scmp.ne.s32.totalorder %s96, %s97
      %p106 = scmp.eq.s32.totalorder %s23, 0
      %p107 = por %p105, %p106
      %p108 = scmp.ne.s32.totalorder %s96, %s97
      %p109 = scmp.eq.s32.totalorder %s24, 1
      %p110 = por %p108, %p109
      %p112 = scmp.ne.s32.totalorder %s97, %s111
      %p113 = scmp.eq.s32.totalorder %s24, 0
      %p114 = por %p112, %p113
      %s116 = sadd.s32 %s115, 1
      %p119 = scmp.eq.s32.totalorder %s18, 1
      %p120 = scmp.ne.s32.totalorder %s115, %s117
      %p121 = scmp.eq.s32.totalorder %s18, 0
      %p122 = por %p120, %p121
      %p123 = scmp.ne.s32.totalorder %s115, %s117
      %p124 = scmp.eq.s32.totalorder %s23, 1
      %p125 = por %p123, %p124
      %p126 = scmp.ne.s32.totalorder %s117, %s118
      %p127 = scmp.eq.s32.totalorder %s23, 0
      %p128 = por %p126, %p127
      %p129 = scmp.ne.s32.totalorder %s117, %s118
      %p130 = scmp.eq.s32.totalorder %s24, 1
      %p131 = por %p129, %p130
      %p133 = scmp.ne.s32.totalorder %s118, %s132
      %p134 = scmp.eq.s32.totalorder %s24, 0
      %p135 = por %p133, %p134
      %s137 = sadd.s32 %s136, 1
      %p140 = scmp.eq.s32.totalorder %s18, 1
      %p141 = scmp.ne.s32.totalorder %s136, %s138
      %p142 = scmp.eq.s32.totalorder %s18, 0
      %p143 = por %p141, %p142
      %p144 = scmp.ne.s32.totalorder %s136, %s138
      %p145 = scmp.eq.s32.totalorder %s23, 1
      %p146 = por %p144, %p145
      %p147 = scmp.ne.s32.totalorder %s138, %s139
      %p148 = scmp.eq.s32.totalorder %s23, 0
      %p149 = por %p147, %p148
      %p150 = scmp.ne.s32.totalorder %s138, %s139
      %p151 = scmp.eq.s32.totalorder %s24, 1
      %p152 = por %p150, %p151
      %p154 = scmp.ne.s32.totalorder %s139, %s153
      %p155 = scmp.eq.s32.totalorder %s24, 0
      %p156 = por %p154, %p155
      %s158 = sadd.s32 %s157, 1
      %p161 = scmp.eq.s32.totalorder %s18, 1
      %p162 = scmp.ne.s32.totalorder %s157, %s159
      %p163 = scmp.eq.s32.totalorder %s18, 0
      %p164 = por %p162, %p163
      %p165 = scmp.ne.s32.totalorder %s157, %s159
      %p166 = scmp.eq.s32.totalorder %s23, 1
      %p167 = por %p165, %p166
      %p168 = scmp.ne.s32.totalorder %s159, %s160
      %p169 = scmp.eq.s32.totalorder %s23, 0
      %p170 = por %p168, %p169
      %p171 = scmp.ne.s32.totalorder %s159, %s160
      %p172 = scmp.eq.s32.totalorder %s24, 1
      %p173 = por %p171, %p172
      %p175 = scmp.ne.s32.totalorder %s160, %s174
      %p176 = scmp.eq.s32.totalorder %s24, 0
      %p177 = por %p175, %p176
      %s179 = sadd.s32 %s178, 1
      %p182 = scmp.eq.s32.totalorder %s18, 1
      %p183 = scmp.ne.s32.totalorder %s178, %s180
      %p184 = scmp.eq.s32.totalorder %s18, 0
      %p185 = por %p183, %p184
      %p186 = scmp.ne.s32.totalorder %s178, %s180
      %p187 = scmp.eq.s32.totalorder %s23, 1
      %p188 = por %p186, %p187
      %p189 = scmp.ne.s32.totalorder %s180, %s181
      %p190 = scmp.eq.s32.totalorder %s23, 0
      %p191 = por %p189, %p190
      %p192 = scmp.ne.s32.totalorder %s180, %s181
      %p193 = scmp.eq.s32.totalorder %s24, 1
      %p194 = por %p192, %p193
      %p196 = scmp.ne.s32.totalorder %s181, %s195
      %p197 = scmp.eq.s32.totalorder %s24, 0
      %p198 = por %p196, %p197
      %s200 = sadd.s32 %s199, 1
      %p203 = scmp.eq.s32.totalorder %s18, 1
      %p204 = scmp.ne.s32.totalorder %s199, %s201
      %p205 = scmp.eq.s32.totalorder %s18, 0
      %p206 = por %p204, %p205
      %p207 = scmp.ne.s32.totalorder %s199, %s201
      %p208 = scmp.eq.s32.totalorder %s23, 1
      %p209 = por %p207, %p208
      %p210 = scmp.ne.s32.totalorder %s201, %s202
      %p211 = scmp.eq.s32.totalorder %s23, 0
      %p212 = por %p210, %p211
      %p213 = scmp.ne.s32.totalorder %s201, %s202
      %p214 = scmp.eq.s32.totalorder %s24, 1
      %p215 = por %p213, %p214
      %p217 = scmp.ne.s32.totalorder %s202, %s216
      %p218 = scmp.eq.s32.totalorder %s24, 0
      %p219 = por %p217, %p218
      %s220 = ssub.s32 %s18, %s25
      %p221 = scmp.eq.s32.totalorder %s220, 0
      %s223 = sadd.s32 %s222, 1
      %s224 = scalar_select %p221, %s222, %s223
      %p227 = pneg %p221
      %p228 = scmp.eq.s32.totalorder %s18, 1
      %p229 = por %p227, %p228
      %p230 = scmp.ne.s32.totalorder %s222, %s225
      %p231 = scmp.eq.s32.totalorder %s18, 0
      %p232 = por %p230, %p231
      %p233 = scmp.ne.s32.totalorder %s222, %s225
      %p234 = scmp.eq.s32.totalorder %s23, 1
      %p235 = por %p233, %p234
      %p236 = scmp.ne.s32.totalorder %s225, %s226
      %p237 = scmp.eq.s32.totalorder %s23, 0
      %p238 = por %p236, %p237
      %p239 = scmp.ne.s32.totalorder %s225, %s226
      %p240 = scmp.eq.s32.totalorder %s24, 1
      %p241 = por %p239, %p240
      %p243 = scmp.ne.s32.totalorder %s226, %s242
      %p244 = scmp.eq.s32.totalorder %s24, 0
      %p245 = por %p243, %p244
      %p246 = scmp.le.s32.totalorder 1, %s18
      %p247 = scmp.lt.s32.totalorder %s18, 3
      %p248 = pnand %p246, %p247
      %p249 = pneg %p248
      // Predicated region
      $region9: #{tpu_custom_call.1} parent=5 // pred_check
        _
      $region10: #{tpu_custom_call.1} parent=5 // pred_check_branch
        %251 = sbr.rel (%p248) target = $region12
      $region11: #{tpu_custom_call.1} parent=5 // pred_region
        %s252 = ssub.s32 %s18, 1
        // Predicated region
        $region13: #{tpu_custom_call.1} parent=11 // pred_check
          %p253 = pneg %p65
        $region14: #{tpu_custom_call.1} parent=11 // pred_check_branch
          %255 = sbr.rel (%p253) target = $region16
        $region15: #{tpu_custom_call.1} parent=11 // pred_region
          _
        $region16: #{tpu_custom_call.1} parent=11 // pred_fallthru
          _
        // Predicated region
        $region17: #{tpu_custom_call.1} parent=11 // pred_check
          %p256 = pneg %p86
        $region18: #{tpu_custom_call.1} parent=11 // pred_check_branch
          %258 = sbr.rel (%p256) target = $region20
        $region19: #{tpu_custom_call.1} parent=11 // pred_region
          _
        $region20: #{tpu_custom_call.1} parent=11 // pred_fallthru
          _
        // Predicated region
        $region21: #{tpu_custom_call.1} parent=11 // pred_check
          %p259 = pneg %p107
        $region22: #{tpu_custom_call.1} parent=11 // pred_check_branch
          %261 = sbr.rel (%p259) target = $region24
        $region23: #{tpu_custom_call.1} parent=11 // pred_region
          _
        $region24: #{tpu_custom_call.1} parent=11 // pred_fallthru
          _
        // Predicated region
        $region25: #{tpu_custom_call.1} parent=11 // pred_check
          %p262 = pneg %p128
        $region26: #{tpu_custom_call.1} parent=11 // pred_check_branch
          %264 = sbr.rel (%p262) target = $region28
        $region27: #{tpu_custom_call.1} parent=11 // pred_region
          _
        $region28: #{tpu_custom_call.1} parent=11 // pred_fallthru
          _
        // Predicated region
        $region29: #{tpu_custom_call.1} parent=11 // pred_check
          %p265 = pneg %p149
        $region30: #{tpu_custom_call.1} parent=11 // pred_check_branch
          %267 = sbr.rel (%p265) target = $region32
        $region31: #{tpu_custom_call.1} parent=11 // pred_region
          _
        $region32: #{tpu_custom_call.1} parent=11 // pred_fallthru
          _
        // Predicated region
        $region33: #{tpu_custom_call.1} parent=11 // pred_check
          %p268 = pneg %p170
        $region34: #{tpu_custom_call.1} parent=11 // pred_check_branch
          %270 = sbr.rel (%p268) target = $region36
        $region35: #{tpu_custom_call.1} parent=11 // pred_region
          _
        $region36: #{tpu_custom_call.1} parent=11 // pred_fallthru
          _
        // Predicated region
        $region37: #{tpu_custom_call.1} parent=11 // pred_check
          %p271 = pneg %p191
        $region38: #{tpu_custom_call.1} parent=11 // pred_check_branch
          %273 = sbr.rel (%p271) target = $region40
        $region39: #{tpu_custom_call.1} parent=11 // pred_region
          _
        $region40: #{tpu_custom_call.1} parent=11 // pred_fallthru
          _
        // Predicated region
        $region41: #{tpu_custom_call.1} parent=11 // pred_check
          %p274 = pneg %p212
        $region42: #{tpu_custom_call.1} parent=11 // pred_check_branch
          %276 = sbr.rel (%p274) target = $region44
        $region43: #{tpu_custom_call.1} parent=11 // pred_region
          _
        $region44: #{tpu_custom_call.1} parent=11 // pred_fallthru
          _
      $region12: #{tpu_custom_call.1} parent=5 // pred_fallthru
        _
      %p277 = scmp.lt.s32.totalorder %s18, 2
      // Predicated region
      $region45: #{tpu_custom_call.1} parent=5 // pred_check
        %p278 = pneg %p277
      $region46: #{tpu_custom_call.1} parent=5 // pred_check_branch
        %280 = sbr.rel (%p278) target = $region48
      $region47: #{tpu_custom_call.1} parent=5 // pred_region
        // Predicated region
        $region49: #{tpu_custom_call.1} parent=47 // pred_check
          %p281 = pneg %p38
        $region50: #{tpu_custom_call.1} parent=47 // pred_check_branch
          %283 = sbr.rel (%p281) target = $region52
        $region51: #{tpu_custom_call.1} parent=47 // pred_region
          %p284 = scmp.lt.s32.totalorder %s18, 1
          %s285 = scalar_select %p284, %s18, 1
          %s286 = smul.addr %s285, 2
          %s287 = smul.addr %s286, 4
          %s288 = scalar_lea.vmem %s0, %s287
        $region52: #{tpu_custom_call.1} parent=47 // pred_fallthru
          _
      $region48: #{tpu_custom_call.1} parent=5 // pred_fallthru
        _
      %p289 = scmp.le.s32.totalorder 1, %s18
      %p290 = scmp.lt.s32.totalorder %s18, 3
      %p291 = pnand %p289, %p290
      %p292 = pneg %p291
      // Predicated region
      $region53: #{tpu_custom_call.1} parent=5 // pred_check
        _
      $region54: #{tpu_custom_call.1} parent=5 // pred_check_branch
        %294 = sbr.rel (%p291) target = $region56
      $region55: #{tpu_custom_call.1} parent=5 // pred_region
        %s295 = ssub.s32 %s18, 1
        %p296 = scmp.lt.s32.totalorder %s23, 1
        %s297 = scalar_select %p296, %s23, 1
        %s298 = smul.addr %s297, 2
        %s299 = smul.addr %s298, 4
        %s300 = scalar_lea.vmem %s0, %s299
        %p301 = pneg %p44
        %p302 = pneg %p41
        %p303 = pneg %p65
        %p304 = pneg %p62
        %p305 = pneg %p86
        %p306 = pneg %p83
        %p307 = pneg %p107
        %p308 = pneg %p104
        %p309 = pneg %p128
        %p310 = pneg %p125
        %p311 = pneg %p149
        %p312 = pneg %p146
        %p313 = pneg %p170
        %p314 = pneg %p167
        %p315 = pneg %p191
        %p316 = pneg %p188
        %p317 = pneg %p212
        %p318 = pneg %p209
        %p319 = pneg %p238
        %p320 = pneg %p235
        %s321 = sand.u32 %s225, 1
        %s322 = scalar_lea.sflag [#allocation3], %s321
        %s323 = sand.u32 %s225, 1
        %s324 = smul.addr %s323, 16
        %s325 = scalar_lea.vmem [#allocation2], %s324
        %p326 = scmp.lt.s32.totalorder %s23, 1
        %s327 = scalar_select %p326, %s23, 1
        %s328 = smul.addr %s327, 2
        %s329 = smul.addr %s328, 4
        %s330 = scalar_lea.vmem %s0, %s329
        %v331 = vld [vmem:[%s330] sm:$0xff]
        %v332 = vld [vmem:[%s1] sm:$0xf]
        %v333 = vld [vmem:[%s7] ss:$2 sm:$0x3]
        %s334 = scalar_lea.vmem %s7, 1
        %v335 = vld [vmem:[%s334] ss:$2 sm:$0x3]
        %v337 = vcombine.high %v331, %v331
        %339 = vrot.lane.b32.xlu0 %v331, 17
        %v340 = vpop.permute.xlu0 %339
        %341 = vrot.lane.b32.xlu0 %v337, 17
        %v342 = vpop.permute.xlu0 %341
        %v343 = vlaneseq
        %v344 = vand.u32 %v343, 127
        %vm345 = vcmp.lt.s32.totalorder %v344, 17
        %v346 = vsel %vm345, %v340, %v342
        %v347 = vsel %vm345, %v342, %v340
        %vm348 = vcmp.ge.s32.totalorder %v333, 1
        %vm349 = vcmp.ge.s32.totalorder %v335, 1
        %vm350 = vmand %vm348, %vm349
        %v351 = vsel %vm350, 1, 0
        %v352 = vcvt.s32.f32 %v351
        %v354 = vlaneseq
        %v355 = vshrl.u32 %v354, 7
        %v356 = vsub.s32 0, %v355
        %v357 = vrot.slane %v352, %v356
        %v358 = vlaneseq
        %v359 = vshrl.u32 %v358, 7
        %v360 = vsub.s32 1, %v359
        %v361 = vrot.slane %v352, %v360
        %v364 = vmul.f32 %v347, %v357
        %v365 = vmul.f32 %v346, %v361
        %367 = vset.pattern.permute.xlu0 0
        %368 = vperm.xlu0 %367, %v332
        %v369 = vpop.permute.xlu0 %368
        %v371 = vmul.f32 %v364, %v369
        %v372 = vmul.f32 %v365, %v369
        %v373 = vadd.f32 %v371, 0.0
        %v374 = vadd.f32 %v372, 0.0
        %375 = vrot.lane.b32.xlu0 %v331, 16
        %v376 = vpop.permute.xlu0 %375
        %377 = vrot.lane.b32.xlu0 %v337, 16
        %v378 = vpop.permute.xlu0 %377
        %vm379 = vcmp.lt.s32.totalorder %v344, 16
        %v380 = vsel %vm379, %v376, %v378
        %v381 = vsel %vm379, %v378, %v376
        %v382 = vsel %vm348, 1, 0
        %v383 = vcvt.s32.f32 %v382
        %v385 = vlaneseq
        %v386 = vshrl.u32 %v385, 7
        %v387 = vsub.s32 0, %v386
        %v388 = vrot.slane %v383, %v387
        %v389 = vlaneseq
        %v390 = vshrl.u32 %v389, 7
        %v391 = vsub.s32 1, %v390
        %v392 = vrot.slane %v383, %v391
        %v395 = vmul.f32 %v381, %v388
        %v396 = vmul.f32 %v380, %v392
        %397 = vset.pattern.permute.xlu0 1
        %398 = vperm.xlu0 %397, %v332
        %v399 = vpop.permute.xlu0 %398
        %v401 = vmul.f32 %v395, %v399
        %v402 = vmul.f32 %v396, %v399
        %v403 = vadd.f32 %v373, %v401
        %v404 = vadd.f32 %v374, %v402
        %405 = vrot.lane.b32.xlu0 %v331, 15
        %v406 = vpop.permute.xlu0 %405
        %407 = vrot.lane.b32.xlu0 %v337, 15
        %v408 = vpop.permute.xlu0 %407
        %vm409 = vcmp.lt.s32.totalorder %v344, 15
        %v410 = vsel %vm409, %v406, %v408
        %v411 = vsel %vm409, %v408, %v406
        %vm412 = vcmp.lt.s32.totalorder %v335, 15
        %vm413 = vmand %vm348, %vm412
        %v414 = vsel %vm413, 1, 0
        %v415 = vcvt.s32.f32 %v414
        %v417 = vlaneseq
        %v418 = vshrl.u32 %v417, 7
        %v419 = vsub.s32 0, %v418
        %v420 = vrot.slane %v415, %v419
        %v421 = vlaneseq
        %v422 = vshrl.u32 %v421, 7
        %v423 = vsub.s32 1, %v422
        %v424 = vrot.slane %v415, %v423
        %v427 = vmul.f32 %v411, %v420
        %v428 = vmul.f32 %v410, %v424
        %429 = vset.pattern.permute.xlu0 2
        %430 = vperm.xlu0 %429, %v332
        %v431 = vpop.permute.xlu0 %430
        %v433 = vmul.f32 %v427, %v431
        %v434 = vmul.f32 %v428, %v431
        %v435 = vadd.f32 %v403, %v433
        %v436 = vadd.f32 %v404, %v434
        %437 = vrot.lane.b32.xlu0 %v331, 1
        %v438 = vpop.permute.xlu0 %437
        %439 = vrot.lane.b32.xlu0 %v337, 1
        %v440 = vpop.permute.xlu0 %439
        %vm441 = vcmp.lt.s32.totalorder %v344, 1
        %v442 = vsel %vm441, %v438, %v440
        %v443 = vsel %vm441, %v440, %v438
        %v444 = vsel %vm349, 1, 0
        %v445 = vcvt.s32.f32 %v444
        %v447 = vlaneseq
        %v448 = vshrl.u32 %v447, 7
        %v449 = vsub.s32 0, %v448
        %v450 = vrot.slane %v445, %v449
        %v451 = vlaneseq
        %v452 = vshrl.u32 %v451, 7
        %v453 = vsub.s32 1, %v452
        %v454 = vrot.slane %v445, %v453
        %v457 = vmul.f32 %v443, %v450
        %v458 = vmul.f32 %v442, %v454
        %459 = vset.pattern.permute.xlu0 3
        %460 = vperm.xlu0 %459, %v332
        %v461 = vpop.permute.xlu0 %460
        %v463 = vmul.f32 %v457, %v461
        %v464 = vmul.f32 %v458, %v461
        %v465 = vadd.f32 %v435, %v463
        %v466 = vadd.f32 %v436, %v464
        %467 = vset.pattern.permute.xlu0 4
        %468 = vperm.xlu0 %467, %v332
        %v469 = vpop.permute.xlu0 %468
        %v471 = vunpack.c.l.s4 839922192
        %v472 = vunpack.c.0.s8 %v471
        %v473 = vlaneseq
        %v474 = vshrl.u32 %v473, 7
        %v475 = vsub.s32 %v472, %v474
        %v476 = vrot.slane %v469, %v475
        %v478 = vmul.f32 %v331, %v476
        %v480 = vcombine.high %v478, %v478
        %v482 = vadd.f32 %v465, %v478
        %v483 = vadd.f32 %v466, %v480
        %484 = vrot.lane.b32.xlu0 %v331, 127
        %v485 = vpop.permute.xlu0 %484
        %486 = vrot.lane.b32.xlu0 %v337, 127
        %v487 = vpop.permute.xlu0 %486
        %vm488 = vcmp.lt.s32.totalorder %v344, 127
        %v489 = vsel %vm488, %v485, %v487
        %v490 = vsel %vm488, %v487, %v485
        %v491 = vsel %vm412, 1, 0
        %v492 = vcvt.s32.f32 %v491
        %v494 = vlaneseq
        %v495 = vshrl.u32 %v494, 7
        %v496 = vsub.s32 0, %v495
        %v497 = vrot.slane %v492, %v496
        %v498 = vlaneseq
        %v499 = vshrl.u32 %v498, 7
        %v500 = vsub.s32 1, %v499
        %v501 = vrot.slane %v492, %v500
        %v504 = vmul.f32 %v489, %v497
        %v505 = vmul.f32 %v490, %v501
        %506 = vset.pattern.permute.xlu0 5
        %507 = vperm.xlu0 %506, %v332
        %v508 = vpop.permute.xlu0 %507
        %v510 = vmul.f32 %v504, %v508
        %v511 = vmul.f32 %v505, %v508
        %v512 = vadd.f32 %v482, %v510
        %v513 = vadd.f32 %v483, %v511
        %514 = vrot.lane.b32.xlu0 %v331, 113
        %v515 = vpop.permute.xlu0 %514
        %516 = vrot.lane.b32.xlu0 %v337, 113
        %v517 = vpop.permute.xlu0 %516
        %vm518 = vcmp.lt.s32.totalorder %v344, 113
        %v519 = vsel %vm518, %v515, %v517
        %v520 = vsel %vm518, %v517, %v515
        %vm521 = vcmp.lt.s32.totalorder %v333, 15
        %vm522 = vmand %vm521, %vm349
        %v523 = vsel %vm522, 1, 0
        %v524 = vcvt.s32.f32 %v523
        %v526 = vlaneseq
        %v527 = vshrl.u32 %v526, 7
        %v528 = vsub.s32 0, %v527
        %v529 = vrot.slane %v524, %v528
        %v530 = vlaneseq
        %v531 = vshrl.u32 %v530, 7
        %v532 = vsub.s32 1, %v531
        %v533 = vrot.slane %v524, %v532
        %v536 = vmul.f32 %v519, %v529
        %v537 = vmul.f32 %v520, %v533
        %538 = vset.pattern.permute.xlu0 6
        %539 = vperm.xlu0 %538, %v332
        %v540 = vpop.permute.xlu0 %539
        %v542 = vmul.f32 %v536, %v540
        %v543 = vmul.f32 %v537, %v540
        %v544 = vadd.f32 %v512, %v542
        %v545 = vadd.f32 %v513, %v543
        %546 = vrot.lane.b32.xlu0 %v331, 112
        %v547 = vpop.permute.xlu0 %546
        %548 = vrot.lane.b32.xlu0 %v337, 112
        %v549 = vpop.permute.xlu0 %548
        %vm550 = vcmp.lt.s32.totalorder %v344, 112
        %v551 = vsel %vm550, %v547, %v549
        %v552 = vsel %vm550, %v549, %v547
        %v553 = vsel %vm521, 1, 0
        %v554 = vcvt.s32.f32 %v553
        %v556 = vlaneseq
        %v557 = vshrl.u32 %v556, 7
        %v558 = vsub.s32 0, %v557
        %v559 = vrot.slane %v554, %v558
        %v560 = vlaneseq
        %v561 = vshrl.u32 %v560, 7
        %v562 = vsub.s32 1, %v561
        %v563 = vrot.slane %v554, %v562
        %v566 = vmul.f32 %v551, %v559
        %v567 = vmul.f32 %v552, %v563
        %568 = vset.pattern.permute.xlu0 7
        %569 = vperm.xlu0 %568, %v332
        %v570 = vpop.permute.xlu0 %569
        %v572 = vmul.f32 %v566, %v570
        %v573 = vmul.f32 %v567, %v570
        %v574 = vadd.f32 %v544, %v572
        %v575 = vadd.f32 %v545, %v573
        %576 = vrot.lane.b32.xlu0 %v331, 111
        %v577 = vpop.permute.xlu0 %576
        %578 = vrot.lane.b32.xlu0 %v337, 111
        %v579 = vpop.permute.xlu0 %578
        %vm580 = vcmp.lt.s32.totalorder %v344, 111
        %v581 = vsel %vm580, %v577, %v579
        %v582 = vsel %vm580, %v579, %v577
        %vm583 = vmand %vm521, %vm412
        %v584 = vsel %vm583, 1, 0
        %v585 = vcvt.s32.f32 %v584
        %v587 = vlaneseq
        %v588 = vshrl.u32 %v587, 7
        %v589 = vsub.s32 0, %v588
        %v590 = vrot.slane %v585, %v589
        %v591 = vlaneseq
        %v592 = vshrl.u32 %v591, 7
        %v593 = vsub.s32 1, %v592
        %v594 = vrot.slane %v585, %v593
        %v597 = vmul.f32 %v581, %v590
        %v598 = vmul.f32 %v582, %v594
        %599 = vset.pattern.permute.xlu0 8
        %600 = vperm.xlu0 %599, %v332
        %v601 = vpop.permute.xlu0 %600
        %v603 = vmul.f32 %v597, %v601
        %v604 = vmul.f32 %v598, %v601
        %v605 = vadd.f32 %v574, %v603
        %v606 = vadd.f32 %v575, %v604
        %v607 = vld [vmem:[%s2] sm:$0xf]
        %609 = vset.pattern.permute.xlu0 0
        %610 = vperm.xlu0 %609, %v607
        %v611 = vpop.permute.xlu0 %610
        %v613 = vadd.f32 %v605, %v611
        %v614 = vadd.f32 %v606, %v611
        %v615 = vld [vmem:[%s8] sm:$0xf]
        %vm616 = vcmask 1043456
        %v617 = vsel %vm616, %v613, 0.0
        %v618 = vsel %vm616, %v614, 0.0
        %v619 = vadd.f32 %v617, %v618
        %620 = vadd.xlane.f32.xlu0 %v619
        %v621 = vpop.xlane.xlu0 %620
        %vm622 = vcmask 31744
        %v624 = vsel %vm622, %v615, 0
        %v627 = vsel %vm616, %v621, 0
        %629 = vmatprep.subr.mxu0 0.0
        %630 = vmatpush1.msra.mxu0 %v627
        %631 = vmatprep.subr.mxu0 0.0
        %632 = vmatpush1.msra.mxu0 0.0
        %633 = vmatprep.subr.mxu0 0.0
        %634 = vmatpush1.msra.mxu0 0.0
        %635 = vmatprep.subr.mxu0 0.0
        %636 = vmatpush1.msra.mxu0 0.0
        %637 = vmatprep.subr.mxu0 0.0
        %638 = vmatpush1.msra.mxu0 0.0
        %639 = vmatprep.subr.mxu0 0.0
        %640 = vmatpush1.msra.mxu0 0.0
        %641 = vmatprep.subr.mxu0 0.0
        %642 = vmatpush1.msra.mxu0 0.0
        %643 = vmatprep.subr.mxu0 0.0
        %644 = vmatpush1.msra.mxu0 0.0
        %645 = vmatprep.subr.mxu0 0.0
        %646 = vmatpush1.msra.mxu0 0.0
        %647 = vmatprep.subr.mxu0 0.0
        %648 = vmatpush1.msra.mxu0 0.0
        %649 = vmatprep.subr.mxu0 0.0
        %650 = vmatpush1.msra.mxu0 0.0
        %651 = vmatprep.subr.mxu0 0.0
        %652 = vmatpush1.msra.mxu0 0.0
        %653 = vmatprep.subr.mxu0 0.0
        %654 = vmatpush1.msra.mxu0 0.0
        %655 = vmatprep.subr.mxu0 0.0
        %656 = vmatpush1.msra.mxu0 0.0
        %657 = vmatprep.subr.mxu0 0.0
        %658 = vmatpush1.msra.mxu0 0.0
        %659 = vmatprep.subr.mxu0 0.0
        %660 = vmatpush1.msra.mxu0 0.0
        %661 = vmatprep.subr.mxu0 0.0
        %662 = vmatpush1.msra.mxu0 0.0
        %663 = vmatprep.subr.mxu0 0.0
        %664 = vmatpush1.msra.mxu0 0.0
        %665 = vmatprep.subr.mxu0 0.0
        %666 = vmatpush1.msra.mxu0 0.0
        %667 = vmatprep.subr.mxu0 0.0
        %668 = vmatpush1.msra.mxu0 0.0
        %669 = vmatprep.subr.mxu0 0.0
        %670 = vmatpush1.msra.mxu0 0.0
        %671 = vmatprep.subr.mxu0 0.0
        %672 = vmatpush1.msra.mxu0 0.0
        %673 = vmatprep.subr.mxu0 0.0
        %674 = vmatpush1.msra.mxu0 0.0
        %675 = vmatprep.subr.mxu0 0.0
        %676 = vmatpush1.msra.mxu0 0.0
        %677 = vmatprep.subr.mxu0 0.0
        %678 = vmatpush1.msra.mxu0 0.0
        %679 = vmatprep.subr.mxu0 0.0
        %680 = vmatpush1.msra.mxu0 0.0
        %681 = vmatprep.subr.mxu0 0.0
        %682 = vmatpush1.msra.mxu0 0.0
        %683 = vmatprep.subr.mxu0 0.0
        %684 = vmatpush1.msra.mxu0 0.0
        %685 = vmatprep.subr.mxu0 0.0
        %686 = vmatpush1.msra.mxu0 0.0
        %687 = vmatprep.subr.mxu0 0.0
        %688 = vmatpush1.msra.mxu0 0.0
        %689 = vmatprep.subr.mxu0 0.0
        %690 = vmatpush1.msra.mxu0 0.0
        %691 = vmatprep.subr.mxu0 0.0
        %692 = vmatpush1.msra.mxu0 0.0
        %693 = vmatprep.mubr.f32.mxu0 0.0
        %694 = vmatmul.mubr.f32.gmra.mrb[0].mxu0 %v624
        %v695 = vpop.f32.mrb[0].mxu0
        %v696 = vadd.f32 0.0, %v695
        %v697 = vpop.f32.mrb[0].mxu0
        %698 = vdwg.mxu0
        %700 = vset.pattern.permute.xlu0 0
        %701 = vperm.xlu0 %700, %v696
        %v702 = vpop.permute.xlu0 %701
        %v704 = vsub.f32 %v613, %v702
        %v705 = vsub.f32 %v614, %v702
        %v706 = vmul.f32 %v704, %v704
        %v707 = vmul.f32 %v705, %v705
        %v708 = vsel %vm616, %v706, 0.0
        %v709 = vsel %vm616, %v707, 0.0
        %v710 = vadd.f32 %v708, %v709
        %711 = vadd.xlane.f32.xlu0 %v710
        %v712 = vpop.xlane.xlu0 %711
        %v714 = vsel %vm616, %v712, 0
        %716 = vmatprep.subr.mxu0 0.0
        %717 = vmatpush1.msra.mxu0 %v714
        %718 = vmatprep.subr.mxu0 0.0
        %719 = vmatpush1.msra.mxu0 0.0
        %720 = vmatprep.subr.mxu0 0.0
        %721 = vmatpush1.msra.mxu0 0.0
        %722 = vmatprep.subr.mxu0 0.0
        %723 = vmatpush1.msra.mxu0 0.0
        %724 = vmatprep.subr.mxu0 0.0
        %725 = vmatpush1.msra.mxu0 0.0
        %726 = vmatprep.subr.mxu0 0.0
        %727 = vmatpush1.msra.mxu0 0.0
        %728 = vmatprep.subr.mxu0 0.0
        %729 = vmatpush1.msra.mxu0 0.0
        %730 = vmatprep.subr.mxu0 0.0
        %731 = vmatpush1.msra.mxu0 0.0
        %732 = vmatprep.subr.mxu0 0.0
        %733 = vmatpush1.msra.mxu0 0.0
        %734 = vmatprep.subr.mxu0 0.0
        %735 = vmatpush1.msra.mxu0 0.0
        %736 = vmatprep.subr.mxu0 0.0
        %737 = vmatpush1.msra.mxu0 0.0
        %738 = vmatprep.subr.mxu0 0.0
        %739 = vmatpush1.msra.mxu0 0.0
        %740 = vmatprep.subr.mxu0 0.0
        %741 = vmatpush1.msra.mxu0 0.0
        %742 = vmatprep.subr.mxu0 0.0
        %743 = vmatpush1.msra.mxu0 0.0
        %744 = vmatprep.subr.mxu0 0.0
        %745 = vmatpush1.msra.mxu0 0.0
        %746 = vmatprep.subr.mxu0 0.0
        %747 = vmatpush1.msra.mxu0 0.0
        %748 = vmatprep.subr.mxu0 0.0
        %749 = vmatpush1.msra.mxu0 0.0
        %750 = vmatprep.subr.mxu0 0.0
        %751 = vmatpush1.msra.mxu0 0.0
        %752 = vmatprep.subr.mxu0 0.0
        %753 = vmatpush1.msra.mxu0 0.0
        %754 = vmatprep.subr.mxu0 0.0
        %755 = vmatpush1.msra.mxu0 0.0
        %756 = vmatprep.subr.mxu0 0.0
        %757 = vmatpush1.msra.mxu0 0.0
        %758 = vmatprep.subr.mxu0 0.0
        %759 = vmatpush1.msra.mxu0 0.0
        %760 = vmatprep.subr.mxu0 0.0
        %761 = vmatpush1.msra.mxu0 0.0
        %762 = vmatprep.subr.mxu0 0.0
        %763 = vmatpush1.msra.mxu0 0.0
        %764 = vmatprep.subr.mxu0 0.0
        %765 = vmatpush1.msra.mxu0 0.0
        %766 = vmatprep.subr.mxu0 0.0
        %767 = vmatpush1.msra.mxu0 0.0
        %768 = vmatprep.subr.mxu0 0.0
        %769 = vmatpush1.msra.mxu0 0.0
        %770 = vmatprep.subr.mxu0 0.0
        %771 = vmatpush1.msra.mxu0 0.0
        %772 = vmatprep.subr.mxu0 0.0
        %773 = vmatpush1.msra.mxu0 0.0
        %774 = vmatprep.subr.mxu0 0.0
        %775 = vmatpush1.msra.mxu0 0.0
        %776 = vmatprep.subr.mxu0 0.0
        %777 = vmatpush1.msra.mxu0 0.0
        %778 = vmatprep.subr.mxu0 0.0
        %779 = vmatpush1.msra.mxu0 0.0
        %780 = vmatprep.mubr.f32.mxu0 0.0
        %781 = vmatmul.mubr.f32.gmra.mrb[0].mxu0 %v624
        %v782 = vpop.f32.mrb[0].mxu0
        %v783 = vadd.f32 1e-05, %v782
        %v784 = vpop.f32.mrb[0].mxu0
        %785 = vdwg.mxu0
        %v786 = vrsqrt.pop %v783
        %v787 = vld [vmem:[%s3] sm:$0xf]
        %v788 = vmul.f32 %v787, %v786
        %790 = vset.pattern.permute.xlu0 0
        %791 = vperm.xlu0 %790, %v788
        %v792 = vpop.permute.xlu0 %791
        %v794 = vmul.f32 %v704, %v792
        %v795 = vmul.f32 %v705, %v792
        %v796 = vld [vmem:[%s4] sm:$0xf]
        %798 = vset.pattern.permute.xlu0 0
        %799 = vperm.xlu0 %798, %v796
        %v800 = vpop.permute.xlu0 %799
        %v802 = vadd.f32 %v794, %v800
        %v803 = vadd.f32 %v795, %v800
        %v804 = vld [vmem:[%s5] sm:$0xff]
        %v805 = vld [vmem:[%s6] sm:$0xff]
        %807 = vset.pattern.permute.xlu0 0
        %808 = vperm.xlu0 %807, %v805
        %v809 = vpop.permute.xlu0 %808
        %v812 = vsel %vm622, %v804, 0
        %v815 = vsel %vm616, %v802, 0
        %v818 = vsel %vm616, %v803, 0
        %820 = vmatprep.subr.mxu0 %v818
        %821 = vmatpush1.msra.mxu0 %v815
        %822 = vmatprep.subr.mxu0 0.0
        %823 = vmatpush1.msra.mxu0 0.0
        %824 = vmatprep.subr.mxu0 0.0
        %825 = vmatpush1.msra.mxu0 0.0
        %826 = vmatprep.subr.mxu0 0.0
        %827 = vmatpush1.msra.mxu0 0.0
        %828 = vmatprep.subr.mxu0 0.0
        %829 = vmatpush1.msra.mxu0 0.0
        %830 = vmatprep.subr.mxu0 0.0
        %831 = vmatpush1.msra.mxu0 0.0
        %832 = vmatprep.subr.mxu0 0.0
        %833 = vmatpush1.msra.mxu0 0.0
        %834 = vmatprep.subr.mxu0 0.0
        %835 = vmatpush1.msra.mxu0 0.0
        %836 = vmatprep.subr.mxu0 0.0
        %837 = vmatpush1.msra.mxu0 0.0
        %838 = vmatprep.subr.mxu0 0.0
        %839 = vmatpush1.msra.mxu0 0.0
        %840 = vmatprep.subr.mxu0 0.0
        %841 = vmatpush1.msra.mxu0 0.0
        %842 = vmatprep.subr.mxu0 0.0
        %843 = vmatpush1.msra.mxu0 0.0
        %844 = vmatprep.subr.mxu0 0.0
        %845 = vmatpush1.msra.mxu0 0.0
        %846 = vmatprep.subr.mxu0 0.0
        %847 = vmatpush1.msra.mxu0 0.0
        %848 = vmatprep.subr.mxu0 0.0
        %849 = vmatpush1.msra.mxu0 0.0
        %850 = vmatprep.subr.mxu0 0.0
        %851 = vmatpush1.msra.mxu0 0.0
        %852 = vmatprep.subr.mxu0 0.0
        %853 = vmatpush1.msra.mxu0 0.0
        %854 = vmatprep.subr.mxu0 0.0
        %855 = vmatpush1.msra.mxu0 0.0
        %856 = vmatprep.subr.mxu0 0.0
        %857 = vmatpush1.msra.mxu0 0.0
        %858 = vmatprep.subr.mxu0 0.0
        %859 = vmatpush1.msra.mxu0 0.0
        %860 = vmatprep.subr.mxu0 0.0
        %861 = vmatpush1.msra.mxu0 0.0
        %862 = vmatprep.subr.mxu0 0.0
        %863 = vmatpush1.msra.mxu0 0.0
        %864 = vmatprep.subr.mxu0 0.0
        %865 = vmatpush1.msra.mxu0 0.0
        %866 = vmatprep.subr.mxu0 0.0
        %867 = vmatpush1.msra.mxu0 0.0
        %868 = vmatprep.subr.mxu0 0.0
        %869 = vmatpush1.msra.mxu0 0.0
        %870 = vmatprep.subr.mxu0 0.0
        %871 = vmatpush1.msra.mxu0 0.0
        %872 = vmatprep.subr.mxu0 0.0
        %873 = vmatpush1.msra.mxu0 0.0
        %874 = vmatprep.subr.mxu0 0.0
        %875 = vmatpush1.msra.mxu0 0.0
        %876 = vmatprep.subr.mxu0 0.0
        %877 = vmatpush1.msra.mxu0 0.0
        %878 = vmatprep.subr.mxu0 0.0
        %879 = vmatpush1.msra.mxu0 0.0
        %880 = vmatprep.subr.mxu0 0.0
        %881 = vmatpush1.msra.mxu0 0.0
        %882 = vmatprep.subr.mxu0 0.0
        %883 = vmatpush1.msra.mxu0 0.0
        %884 = vmatprep.mubr.f32.mxu0 0.0
        %885 = vmatmul.mubr.f32.gmra.mrb[0].mxu0 %v812
        %v886 = vpop.f32.mrb[0].mxu0
        %v887 = vadd.f32 %v809, %v886
        %v888 = vpop.f32.mrb[0].mxu0
        %v889 = vadd.f32 %v809, %v888
        %890 = vdwg.mxu0
        %v891 = vmul.f32 %v887, 0.5
        %v892 = vmul.f32 %v889, 0.5
        %v893 = vmul.f32 %v887, 0.70710677
        %v894 = vmul.f32 %v889, 0.70710677
        %v895 = vand.u32 2147483647, %v893
        %v896 = vand.u32 2147483647, %v894
        %v897 = vmul.f32 %v895, 0.3275911
        %v898 = vmul.f32 %v896, 0.3275911
        %v899 = vadd.f32 %v897, 1.0
        %v900 = vadd.f32 %v898, 1.0
        %v901 = vrcp.pop %v899
        %v902 = vmul.f32 1.0, %v901
        %v903 = vrcp.pop %v900
        %v904 = vmul.f32 1.0, %v903
        %v905 = vmul.f32 %v902, 1.0614054
        %v906 = vmul.f32 %v904, 1.0614054
        %v907 = vadd.f32 %v905, -1.4531521
        %v908 = vadd.f32 %v906, -1.4531521
        %v909 = vmul.f32 %v907, %v902
        %v910 = vmul.f32 %v908, %v904
        %v911 = vadd.f32 %v909, 1.4214138
        %v912 = vadd.f32 %v910, 1.4214138
        %v913 = vmul.f32 %v911, %v902
        %v914 = vmul.f32 %v912, %v904
        %v915 = vadd.f32 %v913, -0.28449672
        %v916 = vadd.f32 %v914, -0.28449672
        %v917 = vmul.f32 %v915, %v902
        %v918 = vmul.f32 %v916, %v904
        %v919 = vadd.f32 %v917, 0.2548296
        %v920 = vadd.f32 %v918, 0.2548296
        %v921 = vmul.f32 %v919, %v902
        %v922 = vmul.f32 %v920, %v904
        %v923 = vsub.f32 0.0, %v895
        %v924 = vsub.f32 0.0, %v896
        %v925 = vmul.f32 %v923, %v895
        %v926 = vmul.f32 %v924, %v896
        %v927 = vmul.f32 %v925, 1.442695
        %v928 = vpow.pop %v927
        %v929 = vmul.f32 %v926, 1.442695
        %v930 = vpow.pop %v929
        %v931 = vmul.f32 %v921, %v928
        %v932 = vmul.f32 %v922, %v930
        %v933 = vsub.f32 1.0, %v931
        %v934 = vsub.f32 1.0, %v932
        %vm935 = vcmp.ge.f32.partialorder %v893, 0.0
        %vm936 = vcmp.ge.f32.partialorder %v894, 0.0
        %v937 = vsub.f32 0.0, %v933
        %v938 = vsub.f32 0.0, %v934
        %v939 = vsel %vm935, %v933, %v937
        %v940 = vsel %vm936, %v934, %v938
        %v941 = vadd.f32 %v939, 1.0
        %v942 = vadd.f32 %v940, 1.0
        %v943 = vmul.f32 %v891, %v941
        %v944 = vmul.f32 %v892, %v942
        %945 = vst [vmem:[%s325] sm:$0xff] %v943
        %946 = vst [vmem:[%s325 + $0x8] sm:$0xff] %v944
        %s947 = sand.u32 %s225, 1
        %s948 = scalar_lea.sflag [#allocation3], %s947
        %s949 = sand.u32 %s225, 1
        %s950 = smul.addr %s949, 16
        %s951 = scalar_lea.vmem [#allocation2], %s950
        // Predicated region
        $region57: #{tpu_custom_call.1} parent=55 // pred_check
          %p952 = pneg %p235
        $region58: #{tpu_custom_call.1} parent=55 // pred_check_branch
          %954 = sbr.rel (%p952) target = $region60
        $region59: #{tpu_custom_call.1} parent=55 // pred_region
          %s956 = ssub.s32 256, 256
          %957 = vsyncadd %s948, %s956
          %s958 = smul.addr %s23, 2
          %s959 = smul.addr %s958, 128
          %s960 = scalar_lea.hbm %s9, %s959
          %s962 = sshll.u32 %s951, 4
          %s963 = int_to_ptr.vmem [resolvable:$true] %s962
          %965 = dma.vmem_to_hbm [thread:$0]  %s963, 256, %s960, %s948
        $region60: #{tpu_custom_call.1} parent=55 // pred_fallthru
          _
      $region56: #{tpu_custom_call.1} parent=5 // pred_fallthru
        _
      %p966 = scmp.le.s32.totalorder 2, %s18
      // Predicated region
      $region61: #{tpu_custom_call.1} parent=5 // pred_check
        %p967 = pneg %p966
      $region62: #{tpu_custom_call.1} parent=5 // pred_check_branch
        %969 = sbr.rel (%p967) target = $region64
      $region63: #{tpu_custom_call.1} parent=5 // pred_region
        %s970 = ssub.s32 %s18, 2
        // Predicated region
        $region65: #{tpu_custom_call.1} parent=63 // pred_check
          %p971 = pneg %p241
        $region66: #{tpu_custom_call.1} parent=63 // pred_check_branch
          %973 = sbr.rel (%p971) target = $region68
        $region67: #{tpu_custom_call.1} parent=63 // pred_region
          %s974 = sand.u32 %s226, 1
          %s975 = scalar_lea.sflag [#allocation3], %s974
          %s976 = sand.u32 %s226, 1
          %s977 = smul.addr %s976, 16
          %s978 = scalar_lea.vmem [#allocation2], %s977
          %979 = dma.done %s975, 256
        $region68: #{tpu_custom_call.1} parent=63 // pred_fallthru
          _
      $region64: #{tpu_custom_call.1} parent=5 // pred_fallthru
        _
    $region6: #{tpu_custom_call.1} parent=1 // loop_footer
      %s22 = sadd.s32 1, %s18
    $region7: #{tpu_custom_call.1} parent=1 // loop_footer_branch
      %17 = sbr.rel target = $region3
    $region8: #{tpu_custom_call.1} parent=1 // loop_exit
      _
    %980 = vsyncpa [#allocation3], 1
    %s981 = scalar_lea.sflag [#allocation3], 1
    %982 = vsyncpa %s981, 1

</llo_original>
